<compile_context>
chip_gen: v7x
topology: tpu7x:2x2x1
jax: 0.10.0
libtpu: 0.0.40
codegen_flags: <defaults>
</compile_context>

<pallas_src>
import functools

import jax
import jax.numpy as jnp
from jax.experimental import pallas as pl
from jax.experimental.pallas import tpu as pltpu


def _rmsnorm_kernel(x_ref, w_ref, o_ref, *, eps):
    # x_ref: (block_rows, dim) tile; w_ref: (1, dim) weight (resident across grid steps).
    x = x_ref[...]
    input_dtype = x.dtype
    xf = x.astype(jnp.float32)                              # f32 accumulation
    variance = jnp.mean(xf * xf, axis=-1, keepdims=True)    # XLU reduce (free slot)
    inv = jax.lax.rsqrt(variance + eps)                     # EUP (free slot)
    normed = (xf * inv).astype(input_dtype)                 # PyTorch cast-order parity
    out = w_ref[...] * normed                               # promotes like torch (f32*bf16 -> f32)
    o_ref[...] = out.astype(o_ref.dtype)


def _sublane_pack(dtype):
    # Sub-32-bit dtypes pack along sublanes: 8 rows for 4B, 16 for 2B, 32 for 1B.
    itemsize = jnp.dtype(dtype).itemsize
    return max(8, 32 // itemsize)


def rms_norm(x, weight, eps=1e-5, out_dtype=None, vmem_budget_bytes=24 << 20):
    """x: (..., dim); weight: (dim,). Returns same shape as x."""
    orig_shape = x.shape
    dim = orig_shape[-1]
    x2d = x.reshape(-1, dim)
    rows = x2d.shape[0]
    w2d = weight.reshape(1, dim)

    if out_dtype is None:
        # Matches the PyTorch module: `self.weight * hidden_states.to(input_dtype)` promotes.
        out_dtype = jnp.promote_types(x.dtype, weight.dtype)
    out_dtype = jnp.dtype(out_dtype)

    in_bytes = jnp.dtype(x.dtype).itemsize
    out_bytes = out_dtype.itemsize
    pack = _sublane_pack(x.dtype)

    # Per-row VMEM footprint: double-buffered input + double-buffered output + ~one f32 temp.
    per_row_bytes = dim * (2 * in_bytes + 2 * out_bytes + 4)
    block_rows = max(pack, (vmem_budget_bytes // per_row_bytes) // pack * pack)
    block_rows = min(block_rows, 1024)

    if rows <= block_rows:
        # Single block: block shape equals the full array dims, so no (8,128) divisibility
        # requirement and no padding/masking needed at all.
        block_rows = rows
        grid = (1,)
    else:
        # Partial last block is handled by Pallas (masked stores); garbage rows in the padded
        # tail never contaminate valid rows because the reduction is per-row (axis=-1).
        grid = (pl.cdiv(rows, block_rows),)

    footprint = block_rows * per_row_bytes + 2 * dim * jnp.dtype(weight.dtype).itemsize
    # >= 32 MiB so large tiles pipeline; < 64 MiB so it always fits v7x physical VMEM.
    vmem_limit = min(max(int(footprint * 5 // 4), 32 << 20), 63 << 20)

    out = pl.pallas_call(
        functools.partial(_rmsnorm_kernel, eps=eps),
        out_shape=jax.ShapeDtypeStruct((rows, dim), out_dtype),
        grid_spec=pltpu.PrefetchScalarGridSpec(
            num_scalar_prefetch=0,
            grid=grid,
            in_specs=[
                pl.BlockSpec((block_rows, dim), lambda i: (i, 0)),
                pl.BlockSpec((1, dim), lambda i: (0, 0)),
            ],
            out_specs=pl.BlockSpec((block_rows, dim), lambda i: (i, 0)),
        ),
        compiler_params=pltpu.CompilerParams(
            dimension_semantics=("parallel",),
            vmem_limit_bytes=vmem_limit,
        ),
    )(x2d, w2d)

    return out.reshape(orig_shape[:-1] + (dim,))


def rms_norm_ref(x, weight, eps=1e-5):
    input_dtype = x.dtype
    xf = x.astype(jnp.float32)
    variance = jnp.mean(xf * xf, axis=-1, keepdims=True)
    xn = (xf * jax.lax.rsqrt(variance + eps)).astype(input_dtype)
    return weight * xn


if __name__ == "__main__":
    key = jax.random.PRNGKey(0)

    # Test 1: small canonical shape (single-block path).
    batch, seq, hidden = 2, 8, 32
    x = jax.random.normal(key, (batch, seq, hidden), dtype=jnp.float32)
    # Deterministic parameter init: PyTorch initializes weight to ones(dim).
    weight = jnp.ones((hidden,), dtype=jnp.float32)

    out = rms_norm(x, weight, eps=1e-5)
    out = jax.block_until_ready(out)
    ref = rms_norm_ref(x, weight, eps=1e-5)
    assert out.shape == x.shape, (out.shape, x.shape)
    assert out.dtype == ref.dtype, (out.dtype, ref.dtype)
    assert jnp.allclose(out, ref, atol=1e-5, rtol=1e-5), "mismatch vs reference (test 1)"

    # Test 2: non-divisible row count + tiny VMEM budget to exercise the multi-block
    # path with a masked partial last block (no pad/slice round trip).
    key2 = jax.random.PRNGKey(0)
    rows2, hidden2 = 74, 128
    x2 = jax.random.normal(key2, (rows2, hidden2), dtype=jnp.float32)
    w2 = jnp.ones((hidden2,), dtype=jnp.float32)
    out2 = jax.block_until_ready(rms_norm(x2, w2, eps=1e-5, vmem_budget_bytes=64 << 10))
    ref2 = rms_norm_ref(x2, w2, eps=1e-5)
    assert out2.shape == x2.shape
    assert jnp.allclose(out2, ref2, atol=1e-5, rtol=1e-5), "mismatch vs reference (test 2)"

    print("KERNEL_OK")
</pallas_src>

<mosaic_0001>
module attributes {stable_mosaic.version = 11 : i64} {
  func.func @_rmsnorm_kernel(%arg0: i32, %arg1: memref<16x32xf32, #tpu.memory_space<vmem>>, %arg2: memref<1x32xf32, #tpu.memory_space<vmem>>, %arg3: memref<16x32xf32, #tpu.memory_space<vmem>>) attributes {dimension_semantics = [#tpu.dimension_semantics<parallel>], iteration_bounds = array<i64: 1>, scalar_prefetch = 0 : i64, scratch_operands = 0 : i64, tpu.core_type = #tpu.core_type<tc>, window_params = [{transform_indices = @transform_0, window_bounds = array<i64: 16, 32>}, {pipeline_mode = #tpu.pipeline_mode<synchronous>, transform_indices = @transform_1, window_bounds = array<i64: 1, 32>}, {transform_indices = @transform_2, window_bounds = array<i64: 16, 32>}]} {
    %c0 = arith.constant 0 : index
    %c0_0 = arith.constant 0 : index
    %0 = vector.load %arg1[%c0, %c0_0] : memref<16x32xf32, #tpu.memory_space<vmem>>, vector<16x32xf32>
    %1 = arith.mulf %0, %0 : vector<16x32xf32>
    %cst = arith.constant dense<0.000000e+00> : vector<16xf32>
    %2 = vector.multi_reduction <add>, %1, %cst [1] : vector<16x32xf32> to vector<16xf32>
    %3 = vector.shape_cast %2 : vector<16xf32> to vector<16x1xf32>
    %cst_1 = arith.constant 3.200000e+01 : f32
    %4 = vector.broadcast %cst_1 : f32 to vector<16x1xf32>
    %5 = arith.divf %3, %4 : vector<16x1xf32>
    %cst_2 = arith.constant 9.99999974E-6 : f32
    %6 = vector.broadcast %cst_2 : f32 to vector<16x1xf32>
    %7 = arith.addf %5, %6 : vector<16x1xf32>
    %8 = math.rsqrt %7 : vector<16x1xf32>
    %9 = vector.broadcast %8 : vector<16x1xf32> to vector<16x32xf32>
    %10 = arith.mulf %0, %9 : vector<16x32xf32>
    %c0_3 = arith.constant 0 : index
    %c0_4 = arith.constant 0 : index
    %11 = vector.load %arg2[%c0_3, %c0_4] : memref<1x32xf32, #tpu.memory_space<vmem>>, vector<1x32xf32>
    %12 = vector.broadcast %11 : vector<1x32xf32> to vector<16x32xf32>
    %13 = arith.mulf %12, %10 : vector<16x32xf32>
    %c0_5 = arith.constant 0 : index
    %c0_6 = arith.constant 0 : index
    %14 = vector.load %arg3[%c0_5, %c0_6] : memref<16x32xf32, #tpu.memory_space<vmem>>, vector<16x32xf32>
    tpu.vector_store %arg3[%c0_5, %c0_6], %13 {strides = array<i32>} : memref<16x32xf32, #tpu.memory_space<vmem>>, vector<16x32xf32>,
    return
  }
  func.func @transform_0(%arg0: i32) -> (i32, i32) {
    %c0_i32 = arith.constant 0 : i32
    %c0_i32_0 = arith.constant 0 : i32
    return %arg0, %c0_i32 : i32, i32
  }
  func.func @transform_1(%arg0: i32) -> (i32, i32) {
    %c0_i32 = arith.constant 0 : i32
    %c0_i32_0 = arith.constant 0 : i32
    %c0_i32_1 = arith.constant 0 : i32
    return %c0_i32, %c0_i32_0 : i32, i32
  }
  func.func @transform_2(%arg0: i32) -> (i32, i32) {
    %c0_i32 = arith.constant 0 : i32
    %c0_i32_0 = arith.constant 0 : i32
    return %arg0, %c0_i32 : i32, i32
  }
}

</mosaic_0001>

<llo_original>
// kernel: tpu_custom_call.1
$region0: #{tpu_custom_call.1}
  #allocation0 [shape = 'u32[]', space=smem, size = 0x4, offset = 0x4, fixed_abs, tag = 'smem constant byte address 0x4 - core index']
  #allocation1 [shape = 'u32[144,128]{1,0:T(1,128)}', space=vmem, size = 0x12000, scoped, tag = 'internal scratch']
  %s0 = inlined_call_operand.hbm [shape: f32[16,32], index: 0, kind: input, shape index: {}]
  %s1 = inlined_call_operand.vmem [shape: f32[1,32], index: 1, kind: input, shape index: {}]
  %s2 = inlined_call_operand.hbm [shape: f32[16,32], index: 2, kind: output, shape index: {}]
  %s3 = sld [smem:[#allocation0]]
  $region22: #{tpu_custom_call.1} parent=0
    _
  %s5 = ssub.s32 1, %s3
  %s6 = scalar_select 0, %s5, %s3
  $region1: #{tpu_custom_call.1} parent=0
    #allocation2 [shape = 'u8[8192]{0}', space=vmem, size = 0x2000, scoped, tag = 'input window, operand 0, single buffered']
    #allocation3 [shape = 's32[1]{0}', space=sflag, size = 0x4, scoped, tag = 'scoped memory for tpu_custom_call.1']
    #allocation4 [shape = 's32[1]{0}', space=sflag, size = 0x4, scoped, tag = 'scoped memory for tpu_custom_call.1']
    #allocation5 [shape = 'u8[8192]{0}', space=vmem, size = 0x2000, scoped, tag = 'output window, operand 0, single buffered']
    %7 = vsyncpa [#allocation3], 0
    %8 = vsyncpa [#allocation4], 0
    // Predicated region
    $region2: #{tpu_custom_call.1} parent=1 // pred_check
      _
    $region3: #{tpu_custom_call.1} parent=1 // pred_check_branch
      %10 = sbr.rel (0) target = $region5
    $region4: #{tpu_custom_call.1} parent=1 // pred_region
      %s12 = ssub.s32 256, 256
      %13 = vsyncadd [#allocation3], %s12
      %s14 = sshll.u32 [#allocation2], 4
      %s15 = int_to_ptr.vmem [resolvable:$true] %s14
      %20 = dma.hbm_to_vmem [thread:$0]  %s0, 256, %s15, [#allocation3], 128, 128, 8
    $region5: #{tpu_custom_call.1} parent=1 // pred_fallthru
      _
    // Predicated region
    $region6: #{tpu_custom_call.1} parent=1 // pred_check
      _
    $region7: #{tpu_custom_call.1} parent=1 // pred_check_branch
      %22 = sbr.rel (0) target = $region9
    $region8: #{tpu_custom_call.1} parent=1 // pred_region
      _
    $region9: #{tpu_custom_call.1} parent=1 // pred_fallthru
      _
    // Predicated region
    $region10: #{tpu_custom_call.1} parent=1 // pred_check
      _
    $region11: #{tpu_custom_call.1} parent=1 // pred_check_branch
      %24 = sbr.rel (0) target = $region13
    $region12: #{tpu_custom_call.1} parent=1 // pred_region
      %25 = dma.done [#allocation3], 256
    $region13: #{tpu_custom_call.1} parent=1 // pred_fallthru
      _
    %v26 = vld [vmem:[#allocation2] sm:$0xff]
    %v27 = vld [vmem:[#allocation2 + $0x8] sm:$0xff]
    %v28 = vmul.f32 %v26, %v26
    %v29 = vmul.f32 %v27, %v27
    %vm30 = vcmask 261120
    %v31 = vsel %vm30, %v28, 0.0
    %32 = vadd.xlane.f32.xlu0 %v31
    %v33 = vpop.xlane.xlu0 %32
    %v34 = vsel %vm30, %v29, 0.0
    %35 = vadd.xlane.f32.xlu0 %v34
    %v36 = vpop.xlane.xlu0 %35
    %v37 = vrcp.pop 32.0
    %v38 = vmul.f32 %v33, %v37
    %v39 = vmul.f32 %v36, %v37
    %v40 = vadd.f32 %v38, 1e-05
    %v41 = vadd.f32 %v39, 1e-05
    %v42 = vrsqrt.pop %v40
    %v43 = vrsqrt.pop %v41
    %v44 = vmul.f32 %v26, %v42
    %v45 = vmul.f32 %v27, %v43
    %v46 = vld [vmem:[%s1] sm:$0x1]
    %v48 = vlaneseq
    %v49 = vshrl.u32 %v48, 7
    %v50 = vsub.s32 0, %v49
    %v51 = vrot.slane %v46, %v50
    %v53 = vmul.f32 %v51, %v44
    %v54 = vmul.f32 %v51, %v45
    %55 = vst.msk [vmem:[#allocation5] sm:$0xff] %vm30, %v53
    %56 = vst.msk [vmem:[#allocation5 + $0x8] sm:$0xff] %vm30, %v54
    // Predicated region
    $region14: #{tpu_custom_call.1} parent=1 // pred_check
      _
    $region15: #{tpu_custom_call.1} parent=1 // pred_check_branch
      %58 = sbr.rel (0) target = $region17
    $region16: #{tpu_custom_call.1} parent=1 // pred_region
      %s60 = ssub.s32 256, 256
      %61 = vsyncadd [#allocation4], %s60
      %s62 = sshll.u32 [#allocation5], 4
      %s63 = int_to_ptr.vmem [resolvable:$true] %s62
      %68 = dma.vmem_to_hbm [thread:$0]  %s63, 256, %s2, [#allocation4], 128, 128, 8
    $region17: #{tpu_custom_call.1} parent=1 // pred_fallthru
      _
    // Predicated region
    $region18: #{tpu_custom_call.1} parent=1 // pred_check
      _
    $region19: #{tpu_custom_call.1} parent=1 // pred_check_branch
      %70 = sbr.rel (0) target = $region21
    $region20: #{tpu_custom_call.1} parent=1 // pred_region
      %71 = dma.done [#allocation4], 256
    $region21: #{tpu_custom_call.1} parent=1 // pred_fallthru
      _
    %72 = vsyncpa [#allocation3], 1
    %73 = vsyncpa [#allocation4], 1

</llo_original>
